<compile_context>
chip_gen: v5e
topology: v5e:2x2
jax: 0.10.0
libtpu: 0.0.40
codegen_flags: <defaults>
</compile_context>

<pallas_src>
import math
import functools

import jax
import jax.numpy as jnp
import numpy as np
from jax.experimental import pallas as pl
from jax.experimental.pallas import tpu as pltpu


def _mha_kernel(k_ref, q_ref, wkx_ref, wqx_ref, linwbd_ref, sel_ref, linb_ref,
                projwt_ref, projb_ref, out_ref, *, n_head, hidden_dim, k_len, tb):
    # k_ref: (TB, L, E) | q_ref: (TB, E) | wkx/wqx/projwt: (E, E)
    # linwbd: (E, H) block-diag Lin weight | sel: (H, E) head->lanes selector
    # linb: (1, 1) scalar in SMEM | projb: (1, E) | out_ref: (TB, E)
    E = n_head * hidden_dim
    inv_sqrt_hd = 1.0 / math.sqrt(hidden_dim)
    mm_dtype = wkx_ref.dtype                     # bf16 on the fast path, else f32

    # ---- input projections: large MXU matmuls, f32 accumulation --------------
    k2 = k_ref[...].reshape(tb * k_len, E)                            # (TB*L, E)
    kx = jnp.tanh(jnp.dot(k2, wkx_ref[...],
                          preferred_element_type=jnp.float32))        # (TB*L, E) f32
    qx = jnp.tanh(jnp.dot(q_ref[...], wqx_ref[...],
                          preferred_element_type=jnp.float32))        # (TB, E)  f32

    kx3 = kx.reshape(tb, k_len, E)
    mem = qx[:, None, :] * kx3                                        # (TB, L, E) f32

    # ---- per-head score via one block-diagonal matmul: (TB*L, E) @ (E, H) ----
    lin_b = linb_ref[0, 0]                                            # SMEM scalar
    s = jnp.dot(mem.reshape(tb * k_len, E).astype(mm_dtype), linwbd_ref[...],
                preferred_element_type=jnp.float32)                   # (TB*L, H)
    score = jnp.tanh(s + lin_b) * inv_sqrt_hd
    score = score.reshape(tb, k_len, n_head)

    # ---- softmax over k_len, independently per batch row & head --------------
    # |score| <= 1/sqrt(hd) <= 1 (tanh bounded), so exp() is numerically safe
    # without the usual max-subtraction (softmax is shift-invariant anyway).
    e = jnp.exp(score)
    denom = jnp.sum(e, axis=1, keepdims=True)
    attn = e * pl.reciprocal(denom, approx=True)                      # (TB, L, H) f32

    # ---- expand per-head weights over that head's hidden lanes, weighted sum -
    if n_head == 1:
        attn_full = jnp.broadcast_to(attn, (tb, k_len, E))
    else:
        attn_full = jnp.dot(attn.reshape(tb * k_len, n_head).astype(mm_dtype),
                            sel_ref[...],
                            preferred_element_type=jnp.float32
                            ).reshape(tb, k_len, E)
    # TODO(synk): for very long k_len this sublane reduction could also move to
    # the MXU (per-head attn^T @ kx); at typical k_len it is cheap.
    out_heads = jnp.sum(attn_full * kx3, axis=1)                      # (TB, E) f32

    # ---- output projection ----------------------------------------------------
    proj = jnp.dot(out_heads.astype(mm_dtype), projwt_ref[...],
                   preferred_element_type=jnp.float32) + projb_ref[...]
    out_ref[...] = proj.astype(out_ref.dtype)
    # nn.Dropout is identity at inference (dropout=0): intentionally not applied.


def _pick_tb(mb, k_len, e, itemsize, align=16):
    """Batch-tile size: fill the MXU (TB*k_len >= 256), stay (8/16,128)-aligned,
    prefer >=2 grid steps (v7x megacore), keep k tile + f32 temps inside VMEM."""
    tb = pl.cdiv(256, max(k_len, 1))
    tb = ((tb + align - 1) // align) * align
    mb_aligned = ((mb + align - 1) // align) * align
    tb = min(tb, max(align, mb_aligned))
    while tb > align and pl.cdiv(mb, tb) < 2:          # keep both v7x TCs busy
        tb -= align

    def footprint(t):  # double-buffered k block + in-kernel f32 temporaries
        return 2 * t * k_len * e * itemsize + 6 * t * k_len * e * 4

    while tb > align and footprint(tb) > 24 * 2**20:
        tb -= align
    return tb


def m_dim_multihead_attention(k, q, params, *, n_head=1, use_bf16=True, tb=None):
    """k: (mb, k_len, E) f32, q: (mb, E) f32 -> (mb, 1, E) f32 (q_len == 1)."""
    mb, k_len, E = k.shape
    assert E % n_head == 0, "embed_dim must be divisible by n_head"
    hidden = E // n_head
    wkx, wqx, lin_w, lin_b, projw_t, projb = params

    mm_dtype = jnp.bfloat16 if use_bf16 else jnp.float32

    # Host-precomputed block-diagonal Lin weight and per-head lane selector.
    eye_blocks = jnp.repeat(jnp.eye(n_head, dtype=jnp.float32), hidden, axis=0)  # (E, H)
    linw_bd = (eye_blocks
               * jnp.tile(lin_w[0].astype(jnp.float32), n_head)[:, None]).astype(mm_dtype)
    sel = eye_blocks.T.astype(mm_dtype)                                           # (H, E)

    kk = k.astype(mm_dtype)
    qq = q.astype(mm_dtype)
    wkx_c = wkx.astype(mm_dtype)
    wqx_c = wqx.astype(mm_dtype)
    projw_c = projw_t.astype(mm_dtype)
    projb_c = projb.astype(jnp.float32)
    linb_c = lin_b.astype(jnp.float32)

    itemsize = jnp.dtype(mm_dtype).itemsize
    if tb is None:
        tb = _pick_tb(mb, k_len, E, itemsize)
    mb_pad = pl.cdiv(mb, tb) * tb
    if mb_pad != mb:                       # zero-pad batch; padded rows sliced off
        kk = jnp.pad(kk, ((0, mb_pad - mb), (0, 0), (0, 0)))
        qq = jnp.pad(qq, ((0, mb_pad - mb), (0, 0)))

    # VMEM budget: double-buffered blocks + resident weights + f32 temporaries.
    est = (2 * tb * k_len * E * itemsize          # k tile
           + 2 * tb * E * itemsize                # q tile
           + 2 * tb * E * 4                       # out tile
           + 2 * 3 * E * E * itemsize             # w_kx, w_qx, proj^T
           + 2 * (E * n_head + n_head * E + E) * 4
           + 6 * tb * k_len * E * 4)              # kx / mem / attn_full temporaries
    vmem_limit = int(min(64 * 2**20, max(32 * 2**20, 2 * est)))

    kernel = functools.partial(_mha_kernel, n_head=n_head, hidden_dim=hidden,
                               k_len=k_len, tb=tb)

    out = pl.pallas_call(
        kernel,
        out_shape=jax.ShapeDtypeStruct((mb_pad, E), jnp.float32),
        grid=(mb_pad // tb,),
        in_specs=[
            pl.BlockSpec((tb, k_len, E), lambda b: (b, 0, 0)),        # k
            pl.BlockSpec((tb, E), lambda b: (b, 0)),                  # q
            pl.BlockSpec((E, E), lambda b: (0, 0)),                   # w_kx
            pl.BlockSpec((E, E), lambda b: (0, 0)),                   # w_qx
            pl.BlockSpec((E, n_head), lambda b: (0, 0)),              # Lin weight (block-diag)
            pl.BlockSpec((n_head, E), lambda b: (0, 0)),              # head selector
            pl.BlockSpec(memory_space=pltpu.MemorySpace.SMEM),        # Lin bias scalar
            pl.BlockSpec((E, E), lambda b: (0, 0)),                   # proj.weight^T
            pl.BlockSpec((1, E), lambda b: (0, 0)),                   # proj.bias
        ],
        out_specs=pl.BlockSpec((tb, E), lambda b: (b, 0)),
        compiler_params=pltpu.CompilerParams(
            dimension_semantics=("parallel",),
            vmem_limit_bytes=vmem_limit),
    )(kk, qq, wkx_c, wqx_c, linw_bd, sel, linb_c, projw_c, projb_c)

    return out[:mb].reshape(mb, 1, E)


def _reference(k, q, params, *, n_head=1):
    """Pure-JAX f32 reference mirroring the PyTorch forward (q_len == 1)."""
    wkx, wqx, lin_w, lin_b, projw_t, projb = params
    mb, k_len, E = k.shape
    hd = E // n_head
    kx = jnp.tanh(jnp.einsum("ble,ef->blf", k, wkx))                    # (mb, L, E)
    qx = jnp.tanh(jnp.einsum("be,ef->bf", q, wqx))[:, None, :]          # (mb, 1, E)
    k_nhead = kx.reshape(mb, k_len, n_head, hd).transpose(0, 2, 1, 3)    # (mb, H, L, hd)
    q_nhead = qx.reshape(mb, 1, n_head, hd).transpose(0, 2, 1, 3)        # (mb, H, 1, hd)
    memory = q_nhead * k_nhead                                           # (mb, H, L, hd)
    score = jnp.tanh(jnp.einsum("bhld,od->bhlo", memory, lin_w) + lin_b[0, 0])
    score = score.transpose(0, 1, 3, 2) / math.sqrt(hd)                  # (mb, H, 1, L)
    score = jax.nn.softmax(score, axis=-1)
    out = jnp.einsum("bhql,bhld->bhqd", score, k_nhead)                  # (mb, H, 1, hd)
    out = out.transpose(0, 2, 1, 3).reshape(mb, 1, n_head * hd)
    return out @ projw_t + projb[0]


def make_params(key, embed_dim, n_head=1):
    hidden = embed_dim // n_head
    stdv = 1.0 / math.sqrt(embed_dim)
    ks = jax.random.split(key, 6)
    wkx = jax.random.uniform(ks[0], (embed_dim, embed_dim), jnp.float32, -stdv, stdv)
    wqx = jax.random.uniform(ks[1], (embed_dim, embed_dim), jnp.float32, -stdv, stdv)
    lin_bound = 1.0 / math.sqrt(hidden)
    lin_w = jax.random.uniform(ks[2], (1, hidden), jnp.float32, -lin_bound, lin_bound)
    lin_b = jax.random.uniform(ks[3], (1, 1), jnp.float32, -lin_bound, lin_bound)
    proj_bound = 1.0 / math.sqrt(embed_dim)
    projw_t = jax.random.uniform(ks[4], (embed_dim, embed_dim), jnp.float32,
                                 -proj_bound, proj_bound)   # stored as W^T
    projb = jax.random.uniform(ks[5], (1, embed_dim), jnp.float32,
                               -proj_bound, proj_bound)
    return (wkx, wqx, lin_w, lin_b, projw_t, projb)


if __name__ == "__main__":
    # ---- config 1: module defaults (n_head=1), small shapes ----
    key = jax.random.PRNGKey(0)
    mb, k_len, embed_dim, n_head = 2, 8, 32, 1
    kp, kk_, kq = jax.random.split(key, 3)
    params = make_params(kp, embed_dim, n_head)
    k = jax.random.normal(kk_, (mb, k_len, embed_dim), jnp.float32)
    q = jax.random.normal(kq, (mb, embed_dim), jnp.float32)   # 2D q -> q_len = 1

    ref = jax.block_until_ready(_reference(k, q, params, n_head=n_head))

    # structural check with f32 matmul operands
    out_f32 = jax.block_until_ready(
        m_dim_multihead_attention(k, q, params, n_head=n_head, use_bf16=False))
    assert out_f32.shape == (mb, 1, embed_dim), out_f32.shape
    np.testing.assert_allclose(np.asarray(out_f32), np.asarray(ref),
                               rtol=2e-2, atol=2e-2)

    # default fast path: bf16 matmul operands, f32 accumulation & elementwise
    out_bf16 = jax.block_until_ready(
        m_dim_multihead_attention(k, q, params, n_head=n_head, use_bf16=True))
    np.testing.assert_allclose(np.asarray(out_bf16), np.asarray(ref),
                               rtol=7e-2, atol=7e-2)

    # ---- config 2: multi-head + batch not a multiple of the batch tile ----
    mb2, n_head2 = 5, 2
    kp2, kk2, kq2 = jax.random.split(jax.random.PRNGKey(1), 3)
    params2 = make_params(kp2, embed_dim, n_head2)
    k2 = jax.random.normal(kk2, (mb2, k_len, embed_dim), jnp.float32)
    q2 = jax.random.normal(kq2, (mb2, embed_dim), jnp.float32)
    ref2 = jax.block_until_ready(_reference(k2, q2, params2, n_head=n_head2))
    out2 = jax.block_until_ready(
        m_dim_multihead_attention(k2, q2, params2, n_head=n_head2, use_bf16=False))
    assert out2.shape == (mb2, 1, embed_dim), out2.shape
    np.testing.assert_allclose(np.asarray(out2), np.asarray(ref2),
                               rtol=2e-2, atol=2e-2)

    print("KERNEL_OK")
</pallas_src>

<mosaic_0001>
module attributes {stable_mosaic.version = 11 : i64} {
  func.func @_mha_kernel(%arg0: i32, %arg1: memref<16x8x32xf32, #tpu.memory_space<vmem>>, %arg2: memref<16x32xf32, #tpu.memory_space<vmem>>, %arg3: memref<32x32xf32, #tpu.memory_space<vmem>>, %arg4: memref<32x32xf32, #tpu.memory_space<vmem>>, %arg5: memref<32x1xf32, #tpu.memory_space<vmem>>, %arg6: memref<1x32xf32, #tpu.memory_space<vmem>>, %arg7: memref<1x1xf32, #tpu.memory_space<smem>>, %arg8: memref<32x32xf32, #tpu.memory_space<vmem>>, %arg9: memref<1x32xf32, #tpu.memory_space<vmem>>, %arg10: memref<16x32xf32, #tpu.memory_space<vmem>>) attributes {dimension_semantics = [#tpu.dimension_semantics<parallel>], iteration_bounds = array<i64: 1>, scalar_prefetch = 0 : i64, scratch_operands = 0 : i64, tpu.core_type = #tpu.core_type<tc>, window_params = [{transform_indices = @transform_0, window_bounds = array<i64: 16, 8, 32>}, {transform_indices = @transform_1, window_bounds = array<i64: 16, 32>}, {pipeline_mode = #tpu.pipeline_mode<synchronous>, transform_indices = @transform_2, window_bounds = array<i64: 32, 32>}, {pipeline_mode = #tpu.pipeline_mode<synchronous>, transform_indices = @transform_3, window_bounds = array<i64: 32, 32>}, {pipeline_mode = #tpu.pipeline_mode<synchronous>, transform_indices = @transform_4, window_bounds = array<i64: 32, 1>}, {pipeline_mode = #tpu.pipeline_mode<synchronous>, transform_indices = @transform_5, window_bounds = array<i64: 1, 32>}, {transform_indices = @transform_6, window_bounds = array<i64: 1, 1>}, {pipeline_mode = #tpu.pipeline_mode<synchronous>, transform_indices = @transform_7, window_bounds = array<i64: 32, 32>}, {pipeline_mode = #tpu.pipeline_mode<synchronous>, transform_indices = @transform_8, window_bounds = array<i64: 1, 32>}, {transform_indices = @transform_9, window_bounds = array<i64: 16, 32>}]} {
    %c0 = arith.constant 0 : index
    %c0_0 = arith.constant 0 : index
    %c0_1 = arith.constant 0 : index
    %0 = vector.load %arg1[%c0, %c0_0, %c0_1] : memref<16x8x32xf32, #tpu.memory_space<vmem>>, vector<16x8x32xf32>
    %1 = vector.shape_cast %0 : vector<16x8x32xf32> to vector<128x32xf32>
    %c0_2 = arith.constant 0 : index
    %c0_3 = arith.constant 0 : index
    %2 = vector.load %arg3[%c0_2, %c0_3] : memref<32x32xf32, #tpu.memory_space<vmem>>, vector<32x32xf32>
    %cst = arith.constant dense<0.000000e+00> : vector<128x32xf32>
    %3 = tpu.matmul %1, %2, %cst {dimension_numbers = #tpu.dot_dimension_numbers<[1], [0], [0], [1], [0, 0, 1, 1], [], []>} : vector<128x32xf32>, vector<32x32xf32>, vector<128x32xf32> -> vector<128x32xf32>
    %4 = math.tanh %3 : vector<128x32xf32>
    %c0_4 = arith.constant 0 : index
    %c0_5 = arith.constant 0 : index
    %5 = vector.load %arg2[%c0_4, %c0_5] : memref<16x32xf32, #tpu.memory_space<vmem>>, vector<16x32xf32>
    %c0_6 = arith.constant 0 : index
    %c0_7 = arith.constant 0 : index
    %6 = vector.load %arg4[%c0_6, %c0_7] : memref<32x32xf32, #tpu.memory_space<vmem>>, vector<32x32xf32>
    %cst_8 = arith.constant dense<0.000000e+00> : vector<16x32xf32>
    %7 = tpu.matmul %5, %6, %cst_8 {dimension_numbers = #tpu.dot_dimension_numbers<[1], [0], [0], [1], [0, 0, 1, 1], [], []>} : vector<16x32xf32>, vector<32x32xf32>, vector<16x32xf32> -> vector<16x32xf32>
    %8 = math.tanh %7 : vector<16x32xf32>
    %9 = vector.shape_cast %4 : vector<128x32xf32> to vector<16x8x32xf32>
    %10 = vector.shape_cast %8 : vector<16x32xf32> to vector<16x1x32xf32>
    %11 = vector.broadcast %10 : vector<16x1x32xf32> to vector<16x8x32xf32>
    %12 = arith.mulf %11, %9 : vector<16x8x32xf32>
    %c0_9 = arith.constant 0 : index
    %c0_10 = arith.constant 0 : index
    %13 = memref.load %arg7[%c0_9, %c0_10] : memref<1x1xf32, #tpu.memory_space<smem>>
    %14 = vector.shape_cast %12 : vector<16x8x32xf32> to vector<128x32xf32>
    %c0_11 = arith.constant 0 : index
    %c0_12 = arith.constant 0 : index
    %15 = vector.load %arg5[%c0_11, %c0_12] : memref<32x1xf32, #tpu.memory_space<vmem>>, vector<32x1xf32>
    %cst_13 = arith.constant dense<0.000000e+00> : vector<128x1xf32>
    %16 = tpu.matmul %14, %15, %cst_13 {dimension_numbers = #tpu.dot_dimension_numbers<[1], [0], [0], [1], [0, 0, 1, 1], [], []>} : vector<128x32xf32>, vector<32x1xf32>, vector<128x1xf32> -> vector<128x1xf32>
    %17 = vector.broadcast %13 : f32 to vector<128x1xf32>
    %18 = arith.addf %16, %17 : vector<128x1xf32>
    %19 = math.tanh %18 : vector<128x1xf32>
    %cst_14 = arith.constant 0.176776692 : f32
    %20 = vector.broadcast %cst_14 : f32 to vector<128x1xf32>
    %21 = arith.mulf %19, %20 : vector<128x1xf32>
    %22 = vector.shape_cast %21 : vector<128x1xf32> to vector<16x8x1xf32>
    %23 = math.exp %22 : vector<16x8x1xf32>
    %cst_15 = arith.constant dense<0.000000e+00> : vector<16x1xf32>
    %24 = vector.multi_reduction <add>, %23, %cst_15 [1] : vector<16x8x1xf32> to vector<16x1xf32>
    %25 = vector.shape_cast %24 : vector<16x1xf32> to vector<16x1x1xf32>
    %26 = tpu.reciprocal %25 {approx = true} : vector<16x1x1xf32> -> vector<16x1x1xf32>
    %27 = vector.broadcast %26 : vector<16x1x1xf32> to vector<16x8x1xf32>
    %28 = arith.mulf %23, %27 : vector<16x8x1xf32>
    %29 = vector.shape_cast %28 : vector<16x8x1xf32> to vector<16x8x1xf32>
    %30 = vector.broadcast %29 : vector<16x8x1xf32> to vector<16x8x32xf32>
    %31 = arith.mulf %30, %9 : vector<16x8x32xf32>
    %cst_16 = arith.constant dense<0.000000e+00> : vector<16x32xf32>
    %32 = vector.multi_reduction <add>, %31, %cst_16 [1] : vector<16x8x32xf32> to vector<16x32xf32>
    %c0_17 = arith.constant 0 : index
    %c0_18 = arith.constant 0 : index
    %33 = vector.load %arg8[%c0_17, %c0_18] : memref<32x32xf32, #tpu.memory_space<vmem>>, vector<32x32xf32>
    %cst_19 = arith.constant dense<0.000000e+00> : vector<16x32xf32>
    %34 = tpu.matmul %32, %33, %cst_19 {dimension_numbers = #tpu.dot_dimension_numbers<[1], [0], [0], [1], [0, 0, 1, 1], [], []>} : vector<16x32xf32>, vector<32x32xf32>, vector<16x32xf32> -> vector<16x32xf32>
    %c0_20 = arith.constant 0 : index
    %c0_21 = arith.constant 0 : index
    %35 = vector.load %arg9[%c0_20, %c0_21] : memref<1x32xf32, #tpu.memory_space<vmem>>, vector<1x32xf32>
    %36 = vector.broadcast %35 : vector<1x32xf32> to vector<16x32xf32>
    %37 = arith.addf %34, %36 : vector<16x32xf32>
    %c0_22 = arith.constant 0 : index
    %c0_23 = arith.constant 0 : index
    %38 = vector.load %arg10[%c0_22, %c0_23] : memref<16x32xf32, #tpu.memory_space<vmem>>, vector<16x32xf32>
    tpu.vector_store %arg10[%c0_22, %c0_23], %37 {strides = array<i32>} : memref<16x32xf32, #tpu.memory_space<vmem>>, vector<16x32xf32>,
    return
  }
  func.func @transform_0(%arg0: i32) -> (i32, i32, i32) {
    %c0_i32 = arith.constant 0 : i32
    %c0_i32_0 = arith.constant 0 : i32
    %c0_i32_1 = arith.constant 0 : i32
    return %arg0, %c0_i32, %c0_i32_0 : i32, i32, i32
  }
  func.func @transform_1(%arg0: i32) -> (i32, i32) {
    %c0_i32 = arith.constant 0 : i32
    %c0_i32_0 = arith.constant 0 : i32
    return %arg0, %c0_i32 : i32, i32
  }
  func.func @transform_2(%arg0: i32) -> (i32, i32) {
    %c0_i32 = arith.constant 0 : i32
    %c0_i32_0 = arith.constant 0 : i32
    %c0_i32_1 = arith.constant 0 : i32
    return %c0_i32, %c0_i32_0 : i32, i32
  }
  func.func @transform_3(%arg0: i32) -> (i32, i32) {
    %c0_i32 = arith.constant 0 : i32
    %c0_i32_0 = arith.constant 0 : i32
    %c0_i32_1 = arith.constant 0 : i32
    return %c0_i32, %c0_i32_0 : i32, i32
  }
  func.func @transform_4(%arg0: i32) -> (i32, i32) {
    %c0_i32 = arith.constant 0 : i32
    %c0_i32_0 = arith.constant 0 : i32
    %c0_i32_1 = arith.constant 0 : i32
    return %c0_i32, %c0_i32_0 : i32, i32
  }
  func.func @transform_5(%arg0: i32) -> (i32, i32) {
    %c0_i32 = arith.constant 0 : i32
    %c0_i32_0 = arith.constant 0 : i32
    %c0_i32_1 = arith.constant 0 : i32
    return %c0_i32, %c0_i32_0 : i32, i32
  }
  func.func @transform_6(%arg0: i32) -> (i32, i32) {
    %c0_i32 = arith.constant 0 : i32
    %c0_i32_0 = arith.constant 0 : i32
    %c0_i32_1 = arith.constant 0 : i32
    return %c0_i32, %c0_i32_0 : i32, i32
  }
  func.func @transform_7(%arg0: i32) -> (i32, i32) {
    %c0_i32 = arith.constant 0 : i32
    %c0_i32_0 = arith.constant 0 : i32
    %c0_i32_1 = arith.constant 0 : i32
    return %c0_i32, %c0_i32_0 : i32, i32
  }
  func.func @transform_8(%arg0: i32) -> (i32, i32) {
    %c0_i32 = arith.constant 0 : i32
    %c0_i32_0 = arith.constant 0 : i32
    %c0_i32_1 = arith.constant 0 : i32
    return %c0_i32, %c0_i32_0 : i32, i32
  }
  func.func @transform_9(%arg0: i32) -> (i32, i32) {
    %c0_i32 = arith.constant 0 : i32
    %c0_i32_0 = arith.constant 0 : i32
    return %arg0, %c0_i32 : i32, i32
  }
}

</mosaic_0001>

<llo_original>
// kernel: tpu_custom_call.1
$region0: #{tpu_custom_call.1}
  #allocation0 [shape = 'u32[]', space=smem, size = 0x4, offset = 0x4, fixed_abs, tag = 'smem constant byte address 0x4 - core index']
  #allocation1 [shape = 'u32[72,128]{1,0:T(1,128)}', space=vmem, size = 0x9000, scoped, tag = 'internal scratch']
  #allocation2 [shape = 'f32[1,1]{1,0:T(1,128)S(6)}', space=smem, size = 0x200, scoped, tag = 'scoped memory for tpu_custom_call.1']
  %s0 = inlined_call_operand.hbm [shape: f32[16,8,32], index: 0, kind: input, shape index: {}]
  %s1 = inlined_call_operand.hbm [shape: f32[16,32], index: 1, kind: input, shape index: {}]
  %s2 = inlined_call_operand.vmem [shape: f32[32,32], index: 2, kind: input, shape index: {}]
  %s3 = inlined_call_operand.hbm [shape: f32[32,32], index: 3, kind: input, shape index: {}]
  %s4 = inlined_call_operand.vmem [shape: f32[32,1], index: 4, kind: input, shape index: {}]
  %s5 = inlined_call_operand.vmem [shape: f32[1,32], index: 5, kind: input, shape index: {}]
  %s6 = inlined_call_operand.<no memory space> [shape: f32[1,1], index: 6, kind: input, shape index: {}]
  %s7 = inlined_call_operand.hbm [shape: f32[32,32], index: 7, kind: input, shape index: {}]
  %s8 = inlined_call_operand.vmem [shape: f32[1,32], index: 8, kind: input, shape index: {}]
  %s9 = inlined_call_operand.hbm [shape: f32[16,32], index: 9, kind: output, shape index: {}]
  %s10 = sld [smem:[#allocation0]]
  $region62: #{tpu_custom_call.1} parent=0
    _
  %s12 = ssub.s32 1, %s10
  %s13 = scalar_select 0, %s12, %s10
  %14 = sst [smem:[#allocation2]] %s6
  $region1: #{tpu_custom_call.1} parent=0
    #allocation3 [shape = 'u8[65536]{0}', space=vmem, size = 0x10000, scoped, tag = 'input window, operand 0, single buffered']
    #allocation4 [shape = 's32[1]{0}', space=sflag, size = 0x4, scoped, tag = 'scoped memory for tpu_custom_call.1']
    #allocation5 [shape = 's32[1]{0}', space=sflag, size = 0x4, scoped, tag = 'scoped memory for tpu_custom_call.1']
    #allocation6 [shape = 'u8[8192]{0}', space=vmem, size = 0x2000, scoped, tag = 'input window, operand 1, single buffered']
    #allocation7 [shape = 's32[1]{0}', space=sflag, size = 0x4, scoped, tag = 'scoped memory for tpu_custom_call.1']
    #allocation8 [shape = 'u8[16384]{0}', space=vmem, size = 0x4000, scoped, tag = 'input window, operand 3, single buffered']
    #allocation9 [shape = 'u8[16384]{0}', space=vmem, size = 0x4000, scoped, tag = 'input window, operand 7, single buffered']
    #allocation10 [shape = 's32[1]{0}', space=sflag, size = 0x4, scoped, tag = 'scoped memory for tpu_custom_call.1']
    #allocation11 [shape = 'u8[8192]{0}', space=vmem, size = 0x2000, scoped, tag = 'output window, operand 0, single buffered']
    %15 = vsyncpa [#allocation4], 0
    %16 = vsyncpa [#allocation7], 0
    %17 = vsyncpa [#allocation10], 0
    %18 = vsyncpa [#allocation5], 0
    // Predicated region
    $region2: #{tpu_custom_call.1} parent=1 // pred_check
      _
    $region3: #{tpu_custom_call.1} parent=1 // pred_check_branch
      %20 = sbr.rel (0) target = $region5
    $region4: #{tpu_custom_call.1} parent=1 // pred_region
      %22 = vsyncadd [#allocation4], 0
      %s23 = sshll.u32 %s0, 4
      %s24 = int_to_ptr.hbm [resolvable:$true] %s23
      %s25 = sshll.u32 [#allocation3], 4
      %s26 = int_to_ptr.vmem [resolvable:$true] %s25
      %31 = dma.hbm_to_vmem [thread:$0]  %s24, 2048, %s26, [#allocation4], 128, 128, 8
    $region5: #{tpu_custom_call.1} parent=1 // pred_fallthru
      _
    // Predicated region
    $region6: #{tpu_custom_call.1} parent=1 // pred_check
      _
    $region7: #{tpu_custom_call.1} parent=1 // pred_check_branch
      %33 = sbr.rel (0) target = $region9
    $region8: #{tpu_custom_call.1} parent=1 // pred_region
      %35 = vsyncadd [#allocation7], 0
      %s36 = sshll.u32 %s1, 4
      %s37 = int_to_ptr.hbm [resolvable:$true] %s36
      %s38 = sshll.u32 [#allocation6], 4
      %s39 = int_to_ptr.vmem [resolvable:$true] %s38
      %44 = dma.hbm_to_vmem [thread:$0]  %s37, 256, %s39, [#allocation7], 128, 128, 8
    $region9: #{tpu_custom_call.1} parent=1 // pred_fallthru
      _
    // Predicated region
    $region10: #{tpu_custom_call.1} parent=1 // pred_check
      _
    $region11: #{tpu_custom_call.1} parent=1 // pred_check_branch
      %46 = sbr.rel (0) target = $region13
    $region12: #{tpu_custom_call.1} parent=1 // pred_region
      _
    $region13: #{tpu_custom_call.1} parent=1 // pred_fallthru
      _
    // Predicated region
    $region14: #{tpu_custom_call.1} parent=1 // pred_check
      _
    $region15: #{tpu_custom_call.1} parent=1 // pred_check_branch
      %48 = sbr.rel (0) target = $region17
    $region16: #{tpu_custom_call.1} parent=1 // pred_region
      %50 = vsyncadd [#allocation7], 0
      %s51 = sshll.u32 %s3, 4
      %s52 = int_to_ptr.hbm [resolvable:$true] %s51
      %s53 = sshll.u32 [#allocation8], 4
      %s54 = int_to_ptr.vmem [resolvable:$true] %s53
      %59 = dma.hbm_to_vmem [thread:$0]  %s52, 512, %s54, [#allocation7], 128, 128, 8
    $region17: #{tpu_custom_call.1} parent=1 // pred_fallthru
      _
    // Predicated region
    $region18: #{tpu_custom_call.1} parent=1 // pred_check
      _
    $region19: #{tpu_custom_call.1} parent=1 // pred_check_branch
      %61 = sbr.rel (0) target = $region21
    $region20: #{tpu_custom_call.1} parent=1 // pred_region
      _
    $region21: #{tpu_custom_call.1} parent=1 // pred_fallthru
      _
    // Predicated region
    $region22: #{tpu_custom_call.1} parent=1 // pred_check
      _
    $region23: #{tpu_custom_call.1} parent=1 // pred_check_branch
      %63 = sbr.rel (0) target = $region25
    $region24: #{tpu_custom_call.1} parent=1 // pred_region
      _
    $region25: #{tpu_custom_call.1} parent=1 // pred_fallthru
      _
    // Predicated region
    $region26: #{tpu_custom_call.1} parent=1 // pred_check
      _
    $region27: #{tpu_custom_call.1} parent=1 // pred_check_branch
      %65 = sbr.rel (0) target = $region29
    $region28: #{tpu_custom_call.1} parent=1 // pred_region
      _
    $region29: #{tpu_custom_call.1} parent=1 // pred_fallthru
      _
    // Predicated region
    $region30: #{tpu_custom_call.1} parent=1 // pred_check
      _
    $region31: #{tpu_custom_call.1} parent=1 // pred_check_branch
      %67 = sbr.rel (0) target = $region33
    $region32: #{tpu_custom_call.1} parent=1 // pred_region
      %69 = vsyncadd [#allocation10], 0
      %s70 = sshll.u32 %s7, 4
      %s71 = int_to_ptr.hbm [resolvable:$true] %s70
      %s72 = sshll.u32 [#allocation9], 4
      %s73 = int_to_ptr.vmem [resolvable:$true] %s72
      %78 = dma.hbm_to_vmem [thread:$0]  %s71, 512, %s73, [#allocation10], 128, 128, 8
    $region33: #{tpu_custom_call.1} parent=1 // pred_fallthru
      _
    // Predicated region
    $region34: #{tpu_custom_call.1} parent=1 // pred_check
      _
    $region35: #{tpu_custom_call.1} parent=1 // pred_check_branch
      %80 = sbr.rel (0) target = $region37
    $region36: #{tpu_custom_call.1} parent=1 // pred_region
      _
    $region37: #{tpu_custom_call.1} parent=1 // pred_fallthru
      _
    // Predicated region
    $region38: #{tpu_custom_call.1} parent=1 // pred_check
      _
    $region39: #{tpu_custom_call.1} parent=1 // pred_check_branch
      %82 = sbr.rel (0) target = $region41
    $region40: #{tpu_custom_call.1} parent=1 // pred_region
      %84 = dma.done [#allocation4], 2048
    $region41: #{tpu_custom_call.1} parent=1 // pred_fallthru
      _
    // Predicated region
    $region42: #{tpu_custom_call.1} parent=1 // pred_check
      _
    $region43: #{tpu_custom_call.1} parent=1 // pred_check_branch
      %86 = sbr.rel (0) target = $region45
    $region44: #{tpu_custom_call.1} parent=1 // pred_region
      %88 = dma.done [#allocation7], 256
    $region45: #{tpu_custom_call.1} parent=1 // pred_fallthru
      _
    // Predicated region
    $region46: #{tpu_custom_call.1} parent=1 // pred_check
      _
    $region47: #{tpu_custom_call.1} parent=1 // pred_check_branch
      %90 = sbr.rel (0) target = $region49
    $region48: #{tpu_custom_call.1} parent=1 // pred_region
      %92 = dma.done [#allocation7], 512
    $region49: #{tpu_custom_call.1} parent=1 // pred_fallthru
      _
    // Predicated region
    $region50: #{tpu_custom_call.1} parent=1 // pred_check
      _
    $region51: #{tpu_custom_call.1} parent=1 // pred_check_branch
      %94 = sbr.rel (0) target = $region53
    $region52: #{tpu_custom_call.1} parent=1 // pred_region
      %96 = dma.done [#allocation10], 512
    $region53: #{tpu_custom_call.1} parent=1 // pred_fallthru
      _
    %v97 = vld [vmem:[#allocation3] sm:$0xff]
    %v98 = vld [vmem:[#allocation3 + $0x8] sm:$0xff]
    %v99 = vld [vmem:[#allocation3 + $0x10] sm:$0xff]
    %v100 = vld [vmem:[#allocation3 + $0x18] sm:$0xff]
    %v101 = vld [vmem:[#allocation3 + $0x20] sm:$0xff]
    %v102 = vld [vmem:[#allocation3 + $0x28] sm:$0xff]
    %v103 = vld [vmem:[#allocation3 + $0x30] sm:$0xff]
    %v104 = vld [vmem:[#allocation3 + $0x38] sm:$0xff]
    %v105 = vld [vmem:[#allocation3 + $0x40] sm:$0xff]
    %v106 = vld [vmem:[#allocation3 + $0x48] sm:$0xff]
    %v107 = vld [vmem:[#allocation3 + $0x50] sm:$0xff]
    %v108 = vld [vmem:[#allocation3 + $0x58] sm:$0xff]
    %v109 = vld [vmem:[#allocation3 + $0x60] sm:$0xff]
    %v110 = vld [vmem:[#allocation3 + $0x68] sm:$0xff]
    %v111 = vld [vmem:[#allocation3 + $0x70] sm:$0xff]
    %v112 = vld [vmem:[#allocation3 + $0x78] sm:$0xff]
    %v113 = vld [vmem:[%s2] sm:$0xff]
    %v114 = vld [vmem:[%s2 + $0x8] sm:$0xff]
    %v115 = vld [vmem:[%s2 + $0x10] sm:$0xff]
    %v116 = vld [vmem:[%s2 + $0x18] sm:$0xff]
    %vm117 = vcmask 261120
    %v119 = vsel %vm117, %v97, 0
    %v122 = vsel %vm117, %v98, 0
    %v125 = vsel %vm117, %v99, 0
    %v128 = vsel %vm117, %v100, 0
    %v131 = vsel %vm117, %v101, 0
    %v134 = vsel %vm117, %v102, 0
    %v137 = vsel %vm117, %v103, 0
    %v140 = vsel %vm117, %v104, 0
    %v143 = vsel %vm117, %v105, 0
    %v146 = vsel %vm117, %v106, 0
    %v149 = vsel %vm117, %v107, 0
    %v152 = vsel %vm117, %v108, 0
    %v155 = vsel %vm117, %v109, 0
    %v158 = vsel %vm117, %v110, 0
    %v161 = vsel %vm117, %v111, 0
    %v164 = vsel %vm117, %v112, 0
    %166 = vmatpush.msra.mxu0 0.0
    %167 = vmatpush.msra.mxu0 0.0
    %168 = vmatpush.msra.mxu0 0.0
    %169 = vmatpush.msra.mxu0 0.0
    %170 = vmatpush.msra.mxu0 0.0
    %171 = vmatpush.msra.mxu0 0.0
    %172 = vmatpush.msra.mxu0 0.0
    %173 = vmatpush.msra.mxu0 0.0
    %174 = vmatpush.msra.mxu0 0.0
    %175 = vmatpush.msra.mxu0 0.0
    %176 = vmatpush.msra.mxu0 0.0
    %177 = vmatpush.msra.mxu0 0.0
    %178 = vmatpush.msra.mxu0 %v116
    %179 = vmatpush.msra.mxu0 %v115
    %180 = vmatpush.msra.mxu0 %v114
    %181 = vmatpush.msra.mxu0 %v113
    %182 = vmatmul.f32.gmra.mxu0 %v119
    %v183 = vpop.f32.mrf.mxu0
    %v184 = vadd.f32 0.0, %v183
    %185 = vmatmul.f32.gmra.mxu0 %v122
    %v186 = vpop.f32.mrf.mxu0
    %v187 = vadd.f32 0.0, %v186
    %188 = vmatmul.f32.gmra.mxu0 %v125
    %v189 = vpop.f32.mrf.mxu0
    %v190 = vadd.f32 0.0, %v189
    %191 = vmatmul.f32.gmra.mxu0 %v128
    %v192 = vpop.f32.mrf.mxu0
    %v193 = vadd.f32 0.0, %v192
    %194 = vmatmul.f32.gmra.mxu0 %v131
    %v195 = vpop.f32.mrf.mxu0
    %v196 = vadd.f32 0.0, %v195
    %197 = vmatmul.f32.gmra.mxu0 %v134
    %v198 = vpop.f32.mrf.mxu0
    %v199 = vadd.f32 0.0, %v198
    %200 = vmatmul.f32.gmra.mxu0 %v137
    %v201 = vpop.f32.mrf.mxu0
    %v202 = vadd.f32 0.0, %v201
    %203 = vmatmul.f32.gmra.mxu0 %v140
    %v204 = vpop.f32.mrf.mxu0
    %v205 = vadd.f32 0.0, %v204
    %206 = vmatmul.f32.gmra.mxu0 %v143
    %v207 = vpop.f32.mrf.mxu0
    %v208 = vadd.f32 0.0, %v207
    %209 = vmatmul.f32.gmra.mxu0 %v146
    %v210 = vpop.f32.mrf.mxu0
    %v211 = vadd.f32 0.0, %v210
    %212 = vmatmul.f32.gmra.mxu0 %v149
    %v213 = vpop.f32.mrf.mxu0
    %v214 = vadd.f32 0.0, %v213
    %215 = vmatmul.f32.gmra.mxu0 %v152
    %v216 = vpop.f32.mrf.mxu0
    %v217 = vadd.f32 0.0, %v216
    %218 = vmatmul.f32.gmra.mxu0 %v155
    %v219 = vpop.f32.mrf.mxu0
    %v220 = vadd.f32 0.0, %v219
    %221 = vmatmul.f32.gmra.mxu0 %v158
    %v222 = vpop.f32.mrf.mxu0
    %v223 = vadd.f32 0.0, %v222
    %224 = vmatmul.f32.gmra.mxu0 %v161
    %v225 = vpop.f32.mrf.mxu0
    %v226 = vadd.f32 0.0, %v225
    %227 = vmatmul.f32.gmra.mxu0 %v164
    %v228 = vpop.f32.mrf.mxu0
    %v229 = vadd.f32 0.0, %v228
    %230 = vdwg.mxu0
    %v231 = vtanh.pop %v184
    %v232 = vtanh.pop %v187
    %v233 = vtanh.pop %v190
    %v234 = vtanh.pop %v193
    %v235 = vtanh.pop %v196
    %v236 = vtanh.pop %v199
    %v237 = vtanh.pop %v202
    %v238 = vtanh.pop %v205
    %v239 = vtanh.pop %v208
    %v240 = vtanh.pop %v211
    %v241 = vtanh.pop %v214
    %v242 = vtanh.pop %v217
    %v243 = vtanh.pop %v220
    %v244 = vtanh.pop %v223
    %v245 = vtanh.pop %v226
    %v246 = vtanh.pop %v229
    %v247 = vld [vmem:[#allocation6] sm:$0xff]
    %v248 = vld [vmem:[#allocation6 + $0x8] sm:$0xff]
    %v249 = vld [vmem:[#allocation8] sm:$0xff]
    %v250 = vld [vmem:[#allocation8 + $0x8] sm:$0xff]
    %v251 = vld [vmem:[#allocation8 + $0x10] sm:$0xff]
    %v252 = vld [vmem:[#allocation8 + $0x18] sm:$0xff]
    %v254 = vsel %vm117, %v247, 0
    %v257 = vsel %vm117, %v248, 0
    %259 = vmatpush.msra.mxu0 0.0
    %260 = vmatpush.msra.mxu0 0.0
    %261 = vmatpush.msra.mxu0 0.0
    %262 = vmatpush.msra.mxu0 0.0
    %263 = vmatpush.msra.mxu0 0.0
    %264 = vmatpush.msra.mxu0 0.0
    %265 = vmatpush.msra.mxu0 0.0
    %266 = vmatpush.msra.mxu0 0.0
    %267 = vmatpush.msra.mxu0 0.0
    %268 = vmatpush.msra.mxu0 0.0
    %269 = vmatpush.msra.mxu0 0.0
    %270 = vmatpush.msra.mxu0 0.0
    %271 = vmatpush.msra.mxu0 %v252
    %272 = vmatpush.msra.mxu0 %v251
    %273 = vmatpush.msra.mxu0 %v250
    %274 = vmatpush.msra.mxu0 %v249
    %275 = vmatmul.f32.gmra.mxu0 %v254
    %v276 = vpop.f32.mrf.mxu0
    %v277 = vadd.f32 0.0, %v276
    %278 = vmatmul.f32.gmra.mxu0 %v257
    %v279 = vpop.f32.mrf.mxu0
    %v280 = vadd.f32 0.0, %v279
    %281 = vdwg.mxu0
    %v282 = vtanh.pop %v277
    %v283 = vtanh.pop %v280
    %v286 = vrot.slane %v282, 1
    %v287 = vrot.slane %v282, 2
    %v288 = vrot.slane %v282, 3
    %v289 = vrot.slane %v282, 4
    %v290 = vrot.slane %v282, 5
    %v291 = vrot.slane %v282, 6
    %v292 = vrot.slane %v282, 7
    %v293 = vrot.slane %v283, 1
    %v294 = vrot.slane %v283, 2
    %v295 = vrot.slane %v283, 3
    %v296 = vrot.slane %v283, 4
    %v297 = vrot.slane %v283, 5
    %v298 = vrot.slane %v283, 6
    %v299 = vrot.slane %v283, 7
    %v300 = vperm.slane %v282, 0
    %v301 = vperm.slane %v286, 0
    %v302 = vperm.slane %v287, 0
    %v303 = vperm.slane %v288, 0
    %v304 = vperm.slane %v289, 0
    %v305 = vperm.slane %v290, 0
    %v306 = vperm.slane %v291, 0
    %v307 = vperm.slane %v292, 0
    %v308 = vperm.slane %v283, 0
    %v309 = vperm.slane %v293, 0
    %v310 = vperm.slane %v294, 0
    %v311 = vperm.slane %v295, 0
    %v312 = vperm.slane %v296, 0
    %v313 = vperm.slane %v297, 0
    %v314 = vperm.slane %v298, 0
    %v315 = vperm.slane %v299, 0
    %v332 = vmul.f32 %v300, %v231
    %v333 = vmul.f32 %v301, %v232
    %v334 = vmul.f32 %v302, %v233
    %v335 = vmul.f32 %v303, %v234
    %v336 = vmul.f32 %v304, %v235
    %v337 = vmul.f32 %v305, %v236
    %v338 = vmul.f32 %v306, %v237
    %v339 = vmul.f32 %v307, %v238
    %v340 = vmul.f32 %v308, %v239
    %v341 = vmul.f32 %v309, %v240
    %v342 = vmul.f32 %v310, %v241
    %v343 = vmul.f32 %v311, %v242
    %v344 = vmul.f32 %v312, %v243
    %v345 = vmul.f32 %v313, %v244
    %v346 = vmul.f32 %v314, %v245
    %v347 = vmul.f32 %v315, %v246
    %s348 = sld [smem:[#allocation2]]
    %v349 = vld [vmem:[%s4] sm:$0xff]
    %v350 = vld [vmem:[%s4 + $0x8] sm:$0xff]
    %v351 = vld [vmem:[%s4 + $0x10] sm:$0xff]
    %v352 = vld [vmem:[%s4 + $0x18] sm:$0xff]
    %v353 = vstv %s348
    %v355 = vsel %vm117, %v332, 0
    %v358 = vsel %vm117, %v333, 0
    %v361 = vsel %vm117, %v334, 0
    %v364 = vsel %vm117, %v335, 0
    %v367 = vsel %vm117, %v336, 0
    %v370 = vsel %vm117, %v337, 0
    %v373 = vsel %vm117, %v338, 0
    %v376 = vsel %vm117, %v339, 0
    %v379 = vsel %vm117, %v340, 0
    %v382 = vsel %vm117, %v341, 0
    %v385 = vsel %vm117, %v342, 0
    %v388 = vsel %vm117, %v343, 0
    %v391 = vsel %vm117, %v344, 0
    %v394 = vsel %vm117, %v345, 0
    %v397 = vsel %vm117, %v346, 0
    %v400 = vsel %vm117, %v347, 0
    %402 = vmatpush.msra.mxu0 0.0
    %403 = vmatpush.msra.mxu0 0.0
    %404 = vmatpush.msra.mxu0 0.0
    %405 = vmatpush.msra.mxu0 0.0
    %406 = vmatpush.msra.mxu0 0.0
    %407 = vmatpush.msra.mxu0 0.0
    %408 = vmatpush.msra.mxu0 0.0
    %409 = vmatpush.msra.mxu0 0.0
    %410 = vmatpush.msra.mxu0 0.0
    %411 = vmatpush.msra.mxu0 0.0
    %412 = vmatpush.msra.mxu0 0.0
    %413 = vmatpush.msra.mxu0 0.0
    %414 = vmatpush.msra.mxu0 %v352
    %415 = vmatpush.msra.mxu0 %v351
    %416 = vmatpush.msra.mxu0 %v350
    %417 = vmatpush.msra.mxu0 %v349
    %418 = vmatmul.f32.gmra.mxu0 %v355
    %v419 = vpop.f32.mrf.mxu0
    %v420 = vadd.f32 %v353, %v419
    %421 = vmatmul.f32.gmra.mxu0 %v358
    %v422 = vpop.f32.mrf.mxu0
    %v423 = vadd.f32 %v353, %v422
    %424 = vmatmul.f32.gmra.mxu0 %v361
    %v425 = vpop.f32.mrf.mxu0
    %v426 = vadd.f32 %v353, %v425
    %427 = vmatmul.f32.gmra.mxu0 %v364
    %v428 = vpop.f32.mrf.mxu0
    %v429 = vadd.f32 %v353, %v428
    %430 = vmatmul.f32.gmra.mxu0 %v367
    %v431 = vpop.f32.mrf.mxu0
    %v432 = vadd.f32 %v353, %v431
    %433 = vmatmul.f32.gmra.mxu0 %v370
    %v434 = vpop.f32.mrf.mxu0
    %v435 = vadd.f32 %v353, %v434
    %436 = vmatmul.f32.gmra.mxu0 %v373
    %v437 = vpop.f32.mrf.mxu0
    %v438 = vadd.f32 %v353, %v437
    %439 = vmatmul.f32.gmra.mxu0 %v376
    %v440 = vpop.f32.mrf.mxu0
    %v441 = vadd.f32 %v353, %v440
    %442 = vmatmul.f32.gmra.mxu0 %v379
    %v443 = vpop.f32.mrf.mxu0
    %v444 = vadd.f32 %v353, %v443
    %445 = vmatmul.f32.gmra.mxu0 %v382
    %v446 = vpop.f32.mrf.mxu0
    %v447 = vadd.f32 %v353, %v446
    %448 = vmatmul.f32.gmra.mxu0 %v385
    %v449 = vpop.f32.mrf.mxu0
    %v450 = vadd.f32 %v353, %v449
    %451 = vmatmul.f32.gmra.mxu0 %v388
    %v452 = vpop.f32.mrf.mxu0
    %v453 = vadd.f32 %v353, %v452
    %454 = vmatmul.f32.gmra.mxu0 %v391
    %v455 = vpop.f32.mrf.mxu0
    %v456 = vadd.f32 %v353, %v455
    %457 = vmatmul.f32.gmra.mxu0 %v394
    %v458 = vpop.f32.mrf.mxu0
    %v459 = vadd.f32 %v353, %v458
    %460 = vmatmul.f32.gmra.mxu0 %v397
    %v461 = vpop.f32.mrf.mxu0
    %v462 = vadd.f32 %v353, %v461
    %463 = vmatmul.f32.gmra.mxu0 %v400
    %v464 = vpop.f32.mrf.mxu0
    %v465 = vadd.f32 %v353, %v464
    %466 = vdwg.mxu0
    %v467 = vtanh.pop %v420
    %v468 = vtanh.pop %v423
    %v469 = vtanh.pop %v426
    %v470 = vtanh.pop %v429
    %v471 = vtanh.pop %v432
    %v472 = vtanh.pop %v435
    %v473 = vtanh.pop %v438
    %v474 = vtanh.pop %v441
    %v475 = vtanh.pop %v444
    %v476 = vtanh.pop %v447
    %v477 = vtanh.pop %v450
    %v478 = vtanh.pop %v453
    %v479 = vtanh.pop %v456
    %v480 = vtanh.pop %v459
    %v481 = vtanh.pop %v462
    %v482 = vtanh.pop %v465
    %v483 = vmul.f32 %v467, 0.17677669
    %v484 = vmul.f32 %v468, 0.17677669
    %v485 = vmul.f32 %v469, 0.17677669
    %v486 = vmul.f32 %v470, 0.17677669
    %v487 = vmul.f32 %v471, 0.17677669
    %v488 = vmul.f32 %v472, 0.17677669
    %v489 = vmul.f32 %v473, 0.17677669
    %v490 = vmul.f32 %v474, 0.17677669
    %v491 = vmul.f32 %v475, 0.17677669
    %v492 = vmul.f32 %v476, 0.17677669
    %v493 = vmul.f32 %v477, 0.17677669
    %v494 = vmul.f32 %v478, 0.17677669
    %v495 = vmul.f32 %v479, 0.17677669
    %v496 = vmul.f32 %v480, 0.17677669
    %v497 = vmul.f32 %v481, 0.17677669
    %v498 = vmul.f32 %v482, 0.17677669
    %v499 = vmul.f32 %v483, 1.442695
    %v500 = vpow.pop %v499
    %v501 = vmul.f32 %v484, 1.442695
    %v502 = vpow.pop %v501
    %v503 = vmul.f32 %v485, 1.442695
    %v504 = vpow.pop %v503
    %v505 = vmul.f32 %v486, 1.442695
    %v506 = vpow.pop %v505
    %v507 = vmul.f32 %v487, 1.442695
    %v508 = vpow.pop %v507
    %v509 = vmul.f32 %v488, 1.442695
    %v510 = vpow.pop %v509
    %v511 = vmul.f32 %v489, 1.442695
    %v512 = vpow.pop %v511
    %v513 = vmul.f32 %v490, 1.442695
    %v514 = vpow.pop %v513
    %v515 = vmul.f32 %v491, 1.442695
    %v516 = vpow.pop %v515
    %v517 = vmul.f32 %v492, 1.442695
    %v518 = vpow.pop %v517
    %v519 = vmul.f32 %v493, 1.442695
    %v520 = vpow.pop %v519
    %v521 = vmul.f32 %v494, 1.442695
    %v522 = vpow.pop %v521
    %v523 = vmul.f32 %v495, 1.442695
    %v524 = vpow.pop %v523
    %v525 = vmul.f32 %v496, 1.442695
    %v526 = vpow.pop %v525
    %v527 = vmul.f32 %v497, 1.442695
    %v528 = vpow.pop %v527
    %v529 = vmul.f32 %v498, 1.442695
    %v530 = vpow.pop %v529
    %vm531 = vcmask 7168
    %v532 = vsel %vm531, %v500, 0.0
    %v533 = vrot.slane %v532, 4
    %v534 = vadd.f32 %v532, %v533
    %v535 = vrot.slane %v534, 2
    %v536 = vadd.f32 %v534, %v535
    %v537 = vrot.slane %v536, 1
    %v538 = vadd.f32 %v536, %v537
    %v539 = vsel %vm531, %v502, 0.0
    %v540 = vrot.slane %v539, 4
    %v541 = vadd.f32 %v539, %v540
    %v542 = vrot.slane %v541, 2
    %v543 = vadd.f32 %v541, %v542
    %v544 = vrot.slane %v543, 1
    %v545 = vadd.f32 %v543, %v544
    %v546 = vsel %vm531, %v504, 0.0
    %v547 = vrot.slane %v546, 4
    %v548 = vadd.f32 %v546, %v547
    %v549 = vrot.slane %v548, 2
    %v550 = vadd.f32 %v548, %v549
    %v551 = vrot.slane %v550, 1
    %v552 = vadd.f32 %v550, %v551
    %v553 = vsel %vm531, %v506, 0.0
    %v554 = vrot.slane %v553, 4
    %v555 = vadd.f32 %v553, %v554
    %v556 = vrot.slane %v555, 2
    %v557 = vadd.f32 %v555, %v556
    %v558 = vrot.slane %v557, 1
    %v559 = vadd.f32 %v557, %v558
    %v560 = vsel %vm531, %v508, 0.0
    %v561 = vrot.slane %v560, 4
    %v562 = vadd.f32 %v560, %v561
    %v563 = vrot.slane %v562, 2
    %v564 = vadd.f32 %v562, %v563
    %v565 = vrot.slane %v564, 1
    %v566 = vadd.f32 %v564, %v565
    %v567 = vsel %vm531, %v510, 0.0
    %v568 = vrot.slane %v567, 4
    %v569 = vadd.f32 %v567, %v568
    %v570 = vrot.slane %v569, 2
    %v571 = vadd.f32 %v569, %v570
    %v572 = vrot.slane %v571, 1
    %v573 = vadd.f32 %v571, %v572
    %v574 = vsel %vm531, %v512, 0.0
    %v575 = vrot.slane %v574, 4
    %v576 = vadd.f32 %v574, %v575
    %v577 = vrot.slane %v576, 2
    %v578 = vadd.f32 %v576, %v577
    %v579 = vrot.slane %v578, 1
    %v580 = vadd.f32 %v578, %v579
    %v581 = vsel %vm531, %v514, 0.0
    %v582 = vrot.slane %v581, 4
    %v583 = vadd.f32 %v581, %v582
    %v584 = vrot.slane %v583, 2
    %v585 = vadd.f32 %v583, %v584
    %v586 = vrot.slane %v585, 1
    %v587 = vadd.f32 %v585, %v586
    %v588 = vsel %vm531, %v516, 0.0
    %v589 = vrot.slane %v588, 4
    %v590 = vadd.f32 %v588, %v589
    %v591 = vrot.slane %v590, 2
    %v592 = vadd.f32 %v590, %v591
    %v593 = vrot.slane %v592, 1
    %v594 = vadd.f32 %v592, %v593
    %v595 = vsel %vm531, %v518, 0.0
    %v596 = vrot.slane %v595, 4
    %v597 = vadd.f32 %v595, %v596
    %v598 = vrot.slane %v597, 2
    %v599 = vadd.f32 %v597, %v598
    %v600 = vrot.slane %v599, 1
    %v601 = vadd.f32 %v599, %v600
    %v602 = vsel %vm531, %v520, 0.0
    %v603 = vrot.slane %v602, 4
    %v604 = vadd.f32 %v602, %v603
    %v605 = vrot.slane %v604, 2
    %v606 = vadd.f32 %v604, %v605
    %v607 = vrot.slane %v606, 1
    %v608 = vadd.f32 %v606, %v607
    %v609 = vsel %vm531, %v522, 0.0
    %v610 = vrot.slane %v609, 4
    %v611 = vadd.f32 %v609, %v610
    %v612 = vrot.slane %v611, 2
    %v613 = vadd.f32 %v611, %v612
    %v614 = vrot.slane %v613, 1
    %v615 = vadd.f32 %v613, %v614
    %v616 = vsel %vm531, %v524, 0.0
    %v617 = vrot.slane %v616, 4
    %v618 = vadd.f32 %v616, %v617
    %v619 = vrot.slane %v618, 2
    %v620 = vadd.f32 %v618, %v619
    %v621 = vrot.slane %v620, 1
    %v622 = vadd.f32 %v620, %v621
    %v623 = vsel %vm531, %v526, 0.0
    %v624 = vrot.slane %v623, 4
    %v625 = vadd.f32 %v623, %v624
    %v626 = vrot.slane %v625, 2
    %v627 = vadd.f32 %v625, %v626
    %v628 = vrot.slane %v627, 1
    %v629 = vadd.f32 %v627, %v628
    %v630 = vsel %vm531, %v528, 0.0
    %v631 = vrot.slane %v630, 4
    %v632 = vadd.f32 %v630, %v631
    %v633 = vrot.slane %v632, 2
    %v634 = vadd.f32 %v632, %v633
    %v635 = vrot.slane %v634, 1
    %v636 = vadd.f32 %v634, %v635
    %v637 = vsel %vm531, %v530, 0.0
    %v638 = vrot.slane %v637, 4
    %v639 = vadd.f32 %v637, %v638
    %v640 = vrot.slane %v639, 2
    %v641 = vadd.f32 %v639, %v640
    %v642 = vrot.slane %v641, 1
    %v643 = vadd.f32 %v641, %v642
    %v644 = vrcp.pop %v538
    %v645 = vrcp.pop %v545
    %v646 = vrcp.pop %v552
    %v647 = vrcp.pop %v559
    %v648 = vrcp.pop %v566
    %v649 = vrcp.pop %v573
    %v650 = vrcp.pop %v580
    %v651 = vrcp.pop %v587
    %v652 = vrcp.pop %v594
    %v653 = vrcp.pop %v601
    %v654 = vrcp.pop %v608
    %v655 = vrcp.pop %v615
    %v656 = vrcp.pop %v622
    %v657 = vrcp.pop %v629
    %v658 = vrcp.pop %v636
    %v659 = vrcp.pop %v643
    %v660 = vmul.f32 %v500, %v644
    %v661 = vmul.f32 %v502, %v645
    %v662 = vmul.f32 %v504, %v646
    %v663 = vmul.f32 %v506, %v647
    %v664 = vmul.f32 %v508, %v648
    %v665 = vmul.f32 %v510, %v649
    %v666 = vmul.f32 %v512, %v650
    %v667 = vmul.f32 %v514, %v651
    %v668 = vmul.f32 %v516, %v652
    %v669 = vmul.f32 %v518, %v653
    %v670 = vmul.f32 %v520, %v654
    %v671 = vmul.f32 %v522, %v655
    %v672 = vmul.f32 %v524, %v656
    %v673 = vmul.f32 %v526, %v657
    %v674 = vmul.f32 %v528, %v658
    %v675 = vmul.f32 %v530, %v659
    %677 = vset.pattern.permute.xlu0 0
    %678 = vperm.xlu0 %677, %v660
    %v679 = vpop.permute.xlu0 %678
    %682 = vset.pattern.permute.xlu0 0
    %683 = vperm.xlu0 %682, %v661
    %v684 = vpop.permute.xlu0 %683
    %687 = vset.pattern.permute.xlu0 0
    %688 = vperm.xlu0 %687, %v662
    %v689 = vpop.permute.xlu0 %688
    %692 = vset.pattern.permute.xlu0 0
    %693 = vperm.xlu0 %692, %v663
    %v694 = vpop.permute.xlu0 %693
    %697 = vset.pattern.permute.xlu0 0
    %698 = vperm.xlu0 %697, %v664
    %v699 = vpop.permute.xlu0 %698
    %702 = vset.pattern.permute.xlu0 0
    %703 = vperm.xlu0 %702, %v665
    %v704 = vpop.permute.xlu0 %703
    %707 = vset.pattern.permute.xlu0 0
    %708 = vperm.xlu0 %707, %v666
    %v709 = vpop.permute.xlu0 %708
    %712 = vset.pattern.permute.xlu0 0
    %713 = vperm.xlu0 %712, %v667
    %v714 = vpop.permute.xlu0 %713
    %717 = vset.pattern.permute.xlu0 0
    %718 = vperm.xlu0 %717, %v668
    %v719 = vpop.permute.xlu0 %718
    %722 = vset.pattern.permute.xlu0 0
    %723 = vperm.xlu0 %722, %v669
    %v724 = vpop.permute.xlu0 %723
    %727 = vset.pattern.permute.xlu0 0
    %728 = vperm.xlu0 %727, %v670
    %v729 = vpop.permute.xlu0 %728
    %732 = vset.pattern.permute.xlu0 0
    %733 = vperm.xlu0 %732, %v671
    %v734 = vpop.permute.xlu0 %733
    %737 = vset.pattern.permute.xlu0 0
    %738 = vperm.xlu0 %737, %v672
    %v739 = vpop.permute.xlu0 %738
    %742 = vset.pattern.permute.xlu0 0
    %743 = vperm.xlu0 %742, %v673
    %v744 = vpop.permute.xlu0 %743
    %747 = vset.pattern.permute.xlu0 0
    %748 = vperm.xlu0 %747, %v674
    %v749 = vpop.permute.xlu0 %748
    %752 = vset.pattern.permute.xlu0 0
    %753 = vperm.xlu0 %752, %v675
    %v754 = vpop.permute.xlu0 %753
    %v756 = vmul.f32 %v679, %v231
    %v757 = vmul.f32 %v684, %v232
    %v758 = vmul.f32 %v689, %v233
    %v759 = vmul.f32 %v694, %v234
    %v760 = vmul.f32 %v699, %v235
    %v761 = vmul.f32 %v704, %v236
    %v762 = vmul.f32 %v709, %v237
    %v763 = vmul.f32 %v714, %v238
    %v764 = vmul.f32 %v719, %v239
    %v765 = vmul.f32 %v724, %v240
    %v766 = vmul.f32 %v729, %v241
    %v767 = vmul.f32 %v734, %v242
    %v768 = vmul.f32 %v739, %v243
    %v769 = vmul.f32 %v744, %v244
    %v770 = vmul.f32 %v749, %v245
    %v771 = vmul.f32 %v754, %v246
    %v772 = vsel %vm117, %v756, 0.0
    %v773 = vrot.slane %v772, 4
    %v774 = vadd.f32 %v772, %v773
    %v775 = vrot.slane %v774, 2
    %v776 = vadd.f32 %v774, %v775
    %v777 = vrot.slane %v776, 1
    %v778 = vadd.f32 %v776, %v777
    %v779 = vsel %vm117, %v757, 0.0
    %v780 = vrot.slane %v779, 4
    %v781 = vadd.f32 %v779, %v780
    %v782 = vrot.slane %v781, 2
    %v783 = vadd.f32 %v781, %v782
    %v784 = vrot.slane %v783, 1
    %v785 = vadd.f32 %v783, %v784
    %v786 = vsel %vm117, %v758, 0.0
    %v787 = vrot.slane %v786, 4
    %v788 = vadd.f32 %v786, %v787
    %v789 = vrot.slane %v788, 2
    %v790 = vadd.f32 %v788, %v789
    %v791 = vrot.slane %v790, 1
    %v792 = vadd.f32 %v790, %v791
    %v793 = vsel %vm117, %v759, 0.0
    %v794 = vrot.slane %v793, 4
    %v795 = vadd.f32 %v793, %v794
    %v796 = vrot.slane %v795, 2
    %v797 = vadd.f32 %v795, %v796
    %v798 = vrot.slane %v797, 1
    %v799 = vadd.f32 %v797, %v798
    %v800 = vsel %vm117, %v760, 0.0
    %v801 = vrot.slane %v800, 4
    %v802 = vadd.f32 %v800, %v801
    %v803 = vrot.slane %v802, 2
    %v804 = vadd.f32 %v802, %v803
    %v805 = vrot.slane %v804, 1
    %v806 = vadd.f32 %v804, %v805
    %v807 = vsel %vm117, %v761, 0.0
    %v808 = vrot.slane %v807, 4
    %v809 = vadd.f32 %v807, %v808
    %v810 = vrot.slane %v809, 2
    %v811 = vadd.f32 %v809, %v810
    %v812 = vrot.slane %v811, 1
    %v813 = vadd.f32 %v811, %v812
    %v814 = vsel %vm117, %v762, 0.0
    %v815 = vrot.slane %v814, 4
    %v816 = vadd.f32 %v814, %v815
    %v817 = vrot.slane %v816, 2
    %v818 = vadd.f32 %v816, %v817
    %v819 = vrot.slane %v818, 1
    %v820 = vadd.f32 %v818, %v819
    %v821 = vsel %vm117, %v763, 0.0
    %v822 = vrot.slane %v821, 4
    %v823 = vadd.f32 %v821, %v822
    %v824 = vrot.slane %v823, 2
    %v825 = vadd.f32 %v823, %v824
    %v826 = vrot.slane %v825, 1
    %v827 = vadd.f32 %v825, %v826
    %v828 = vsel %vm117, %v764, 0.0
    %v829 = vrot.slane %v828, 4
    %v830 = vadd.f32 %v828, %v829
    %v831 = vrot.slane %v830, 2
    %v832 = vadd.f32 %v830, %v831
    %v833 = vrot.slane %v832, 1
    %v834 = vadd.f32 %v832, %v833
    %v835 = vsel %vm117, %v765, 0.0
    %v836 = vrot.slane %v835, 4
    %v837 = vadd.f32 %v835, %v836
    %v838 = vrot.slane %v837, 2
    %v839 = vadd.f32 %v837, %v838
    %v840 = vrot.slane %v839, 1
    %v841 = vadd.f32 %v839, %v840
    %v842 = vsel %vm117, %v766, 0.0
    %v843 = vrot.slane %v842, 4
    %v844 = vadd.f32 %v842, %v843
    %v845 = vrot.slane %v844, 2
    %v846 = vadd.f32 %v844, %v845
    %v847 = vrot.slane %v846, 1
    %v848 = vadd.f32 %v846, %v847
    %v849 = vsel %vm117, %v767, 0.0
    %v850 = vrot.slane %v849, 4
    %v851 = vadd.f32 %v849, %v850
    %v852 = vrot.slane %v851, 2
    %v853 = vadd.f32 %v851, %v852
    %v854 = vrot.slane %v853, 1
    %v855 = vadd.f32 %v853, %v854
    %v856 = vsel %vm117, %v768, 0.0
    %v857 = vrot.slane %v856, 4
    %v858 = vadd.f32 %v856, %v857
    %v859 = vrot.slane %v858, 2
    %v860 = vadd.f32 %v858, %v859
    %v861 = vrot.slane %v860, 1
    %v862 = vadd.f32 %v860, %v861
    %v863 = vsel %vm117, %v769, 0.0
    %v864 = vrot.slane %v863, 4
    %v865 = vadd.f32 %v863, %v864
    %v866 = vrot.slane %v865, 2
    %v867 = vadd.f32 %v865, %v866
    %v868 = vrot.slane %v867, 1
    %v869 = vadd.f32 %v867, %v868
    %v870 = vsel %vm117, %v770, 0.0
    %v871 = vrot.slane %v870, 4
    %v872 = vadd.f32 %v870, %v871
    %v873 = vrot.slane %v872, 2
    %v874 = vadd.f32 %v872, %v873
    %v875 = vrot.slane %v874, 1
    %v876 = vadd.f32 %v874, %v875
    %v877 = vsel %vm117, %v771, 0.0
    %v878 = vrot.slane %v877, 4
    %v879 = vadd.f32 %v877, %v878
    %v880 = vrot.slane %v879, 2
    %v881 = vadd.f32 %v879, %v880
    %v882 = vrot.slane %v881, 1
    %v883 = vadd.f32 %v881, %v882
    %v884 = vld [vmem:[#allocation9] sm:$0xff]
    %v885 = vld [vmem:[#allocation9 + $0x8] sm:$0xff]
    %v886 = vld [vmem:[#allocation9 + $0x10] sm:$0xff]
    %v887 = vld [vmem:[#allocation9 + $0x18] sm:$0xff]
    %v888 = vld [vmem:[%s8] sm:$0x1]
    %v890 = vperm.slane %v888, 0
    %vm908 = vcmask 1041409
    %v909 = vsel %vm908, %v785, %v778
    %vm910 = vcmask 1042434
    %v911 = vsel %vm910, %v792, %v909
    %vm912 = vcmask 1043459
    %v913 = vsel %vm912, %v799, %v911
    %vm914 = vcmask 1044484
    %v915 = vsel %vm914, %v806, %v913
    %vm916 = vcmask 1045509
    %v917 = vsel %vm916, %v813, %v915
    %vm918 = vcmask 1046534
    %v919 = vsel %vm918, %v820, %v917
    %vm920 = vcmask 1047559
    %v921 = vsel %vm920, %v827, %v919
    %v922 = vsel %vm908, %v841, %v834
    %v923 = vsel %vm910, %v848, %v922
    %v924 = vsel %vm912, %v855, %v923
    %v925 = vsel %vm914, %v862, %v924
    %v926 = vsel %vm916, %v869, %v925
    %v927 = vsel %vm918, %v876, %v926
    %v928 = vsel %vm920, %v883, %v927
    %v929 = vsel %vm117, %v921, 0
    %v931 = vsel %vm117, %v928, 0
    %933 = vmatpush.msra.mxu0 0.0
    %934 = vmatpush.msra.mxu0 0.0
    %935 = vmatpush.msra.mxu0 0.0
    %936 = vmatpush.msra.mxu0 0.0
    %937 = vmatpush.msra.mxu0 0.0
    %938 = vmatpush.msra.mxu0 0.0
    %939 = vmatpush.msra.mxu0 0.0
    %940 = vmatpush.msra.mxu0 0.0
    %941 = vmatpush.msra.mxu0 0.0
    %942 = vmatpush.msra.mxu0 0.0
    %943 = vmatpush.msra.mxu0 0.0
    %944 = vmatpush.msra.mxu0 0.0
    %945 = vmatpush.msra.mxu0 %v887
    %946 = vmatpush.msra.mxu0 %v886
    %947 = vmatpush.msra.mxu0 %v885
    %948 = vmatpush.msra.mxu0 %v884
    %949 = vmatmul.f32.gmra.mxu0 %v929
    %v950 = vpop.f32.mrf.mxu0
    %v951 = vadd.f32 %v890, %v950
    %952 = vmatmul.f32.gmra.mxu0 %v931
    %v953 = vpop.f32.mrf.mxu0
    %v954 = vadd.f32 %v890, %v953
    %955 = vdwg.mxu0
    %956 = vst.msk [vmem:[#allocation11] sm:$0xff] %vm117, %v951
    %957 = vst.msk [vmem:[#allocation11 + $0x8] sm:$0xff] %vm117, %v954
    // Predicated region
    $region54: #{tpu_custom_call.1} parent=1 // pred_check
      _
    $region55: #{tpu_custom_call.1} parent=1 // pred_check_branch
      %959 = sbr.rel (0) target = $region57
    $region56: #{tpu_custom_call.1} parent=1 // pred_region
      %961 = vsyncadd [#allocation5], 0
      %s962 = sshll.u32 [#allocation11], 4
      %s963 = int_to_ptr.vmem [resolvable:$true] %s962
      %s964 = sshll.u32 %s9, 4
      %s965 = int_to_ptr.hbm [resolvable:$true] %s964
      %970 = dma.vmem_to_hbm [thread:$0]  %s963, 256, %s965, [#allocation5], 128, 128, 8
    $region57: #{tpu_custom_call.1} parent=1 // pred_fallthru
      _
    // Predicated region
    $region58: #{tpu_custom_call.1} parent=1 // pred_check
      _
    $region59: #{tpu_custom_call.1} parent=1 // pred_check_branch
      %972 = sbr.rel (0) target = $region61
    $region60: #{tpu_custom_call.1} parent=1 // pred_region
      %974 = dma.done [#allocation5], 256
    $region61: #{tpu_custom_call.1} parent=1 // pred_fallthru
      _
    %975 = vsyncpa [#allocation4], 1
    %976 = vsyncpa [#allocation7], 1
    %977 = vsyncpa [#allocation10], 1
    %978 = vsyncpa [#allocation5], 1

</llo_original>
